<compile_context>
chip_gen: v7x
topology: tpu7x:2x2x1
jax: 0.10.0
libtpu: 0.0.40
codegen_flags: <defaults>
</compile_context>

<pallas_src>
import functools

import jax
import jax.numpy as jnp
from jax import lax
from jax.experimental import pallas as pl
from jax.experimental.pallas import tpu as pltpu


def _round_up(x, m):
    return ((x + m - 1) // m) * m


# ----------------------------- Pallas kernel --------------------------------
def _token_encoder_kernel(ne_idx_ref,   # (TR, 1) int32: combined node/edge index per row
                          pos_id_ref,   # (TR, 1) int32: concat-order position per row
                          ne_tab_ref,   # (K_pad, D) f32: [node_table ++ edge_table]
                          val_tab_ref,  # (V, D)     f32: token-value table
                          pos_tab_ref,  # (L_pad, D) f32: concat-order positional rows
                          vmat_ref,     # (TR, V)    f32: val-branch rows (tile aligned)
                          out_ref,      # (TR, D)    f32
                          *, TR, R_ne, K_pad, L_pad):
    t = pl.program_id(0)
    row0 = t * TR

    # Positional rows for the whole tile: one-hot(pos_id) @ pos_table (MXU).
    pos_oh = (pos_id_ref[...] ==
              lax.broadcasted_iota(jnp.int32, (TR, L_pad), 1)).astype(jnp.float32)
    pos = jnp.dot(pos_oh, pos_tab_ref[...], preferred_element_type=jnp.float32)

    def gather_rows():
        # node/edge embedding lookup as one-hot @ table (K is tiny, MXU is idle).
        oh = (ne_idx_ref[...] ==
              lax.broadcasted_iota(jnp.int32, (TR, K_pad), 1)).astype(jnp.float32)
        return jnp.dot(oh, ne_tab_ref[...], preferred_element_type=jnp.float32)

    def val_rows():
        return jnp.dot(vmat_ref[...], val_tab_ref[...],
                       preferred_element_type=jnp.float32)

    all_gather = row0 + TR <= R_ne          # tile entirely in node/edge branch
    all_val = row0 >= R_ne                  # tile entirely in val branch

    @pl.when(all_gather)
    def _():
        out_ref[...] = (gather_rows() + pos).astype(out_ref.dtype)

    @pl.when(all_val)
    def _():
        out_ref[...] = (val_rows() + pos).astype(out_ref.dtype)

    # At most one tile straddles the branch boundary: per-row select.
    @pl.when(jnp.logical_and(jnp.logical_not(all_gather), jnp.logical_not(all_val)))
    def _():
        rows = row0 + lax.broadcasted_iota(jnp.int32, (TR, 1), 0)
        mixed = jnp.where(rows < R_ne, gather_rows(), val_rows())
        out_ref[...] = (mixed + pos).astype(out_ref.dtype)


# ----------------------------- Module wrapper --------------------------------
class TokenEncoderPallas:
    """JAX/Pallas equivalent of TokenEncoder (dropout=0.0)."""

    def __init__(self, n_node_types, n_edge_types, n_token_vocab, embed_dim,
                 max_len=50, key=None):
        if key is None:
            key = jax.random.PRNGKey(0)
        ks = jax.random.split(key, 6)
        s = 0.02
        self.node_table = s * jax.random.normal(ks[0], (n_node_types, embed_dim), jnp.float32)
        self.edge_table = s * jax.random.normal(ks[1], (n_edge_types, embed_dim), jnp.float32)
        self.val_table = s * jax.random.normal(ks[2], (n_token_vocab, embed_dim), jnp.float32)
        # LearnedPositionalEncoder.pos_embed parameters (max_len, d_model)
        self.pos_node = s * jax.random.normal(ks[3], (max_len, embed_dim), jnp.float32)
        self.pos_edge = s * jax.random.normal(ks[4], (max_len, embed_dim), jnp.float32)
        self.pos_val = s * jax.random.normal(ks[5], (max_len, embed_dim), jnp.float32)
        self.embed_dim = embed_dim
        self.n_node_types = n_node_types
        self.n_edge_types = n_edge_types

    @staticmethod
    def _pick_row_tile(rows, row_bytes):
        # Biggest multiple-of-8 row tile that leaves >=2 grid blocks (megacore)
        # and keeps double-buffered streamed blocks well inside VMEM.
        budget = 8 << 20
        for tr in (512, 256, 128, 64, 32, 16, 8):
            if rows >= 2 * tr and 4 * tr * row_bytes <= budget:
                return tr
        return 8

    def __call__(self, node_idx, edge_idx, node_val_mat):
        L_n, B = node_idx.shape
        L_e, _ = edge_idx.shape
        D = self.embed_dim
        V = self.val_table.shape[0]
        L_total = 2 * L_n + L_e
        R = L_total * B                    # total flattened output rows
        R_ne = (L_n + L_e) * B             # rows served by the node/edge gather branch
        R_val = L_n * B                    # rows served by the val matmul branch

        TR = self._pick_row_tile(R, (V + D + 2) * 4)
        n_tiles = pl.cdiv(R, TR)
        n_ne_tiles = pl.cdiv(R_ne, TR)
        ne_full_tiles = R_ne // TR
        n_val_tiles = n_tiles - ne_full_tiles
        pad_front = R_ne % TR              # aligns vmat row tiles with output row tiles

        # --- combined node+edge embedding table (gather branch), 8-row padded ---
        K_ne = self.n_node_types + self.n_edge_types
        K_pad = _round_up(K_ne, 8)
        ne_table = jnp.concatenate([self.node_table, self.edge_table], axis=0)
        ne_table = jnp.pad(ne_table, ((0, K_pad - K_ne), (0, 0)))

        # --- per-row gather indices (edge indices offset into the combined table) ---
        ne_idx = jnp.concatenate(
            [node_idx.astype(jnp.int32),
             edge_idx.astype(jnp.int32) + self.n_node_types], axis=0
        ).reshape(R_ne, 1)
        ne_idx = jnp.pad(ne_idx, ((0, n_ne_tiles * TR - R_ne), (0, 0)))

        # --- resident positional table (concat order) + per-row position id ---
        L_pad = _round_up(L_total, 8)
        pos_table = jnp.concatenate(
            [self.pos_node[:L_n], self.pos_edge[:L_e], self.pos_val[:L_n]], axis=0)
        pos_table = jnp.pad(pos_table, ((0, L_pad - L_total), (0, 0)))
        pos_id = jnp.repeat(jnp.arange(L_total, dtype=jnp.int32), B).reshape(R, 1)
        pos_id = jnp.pad(pos_id, ((0, n_tiles * TR - R), (0, 0)))

        # --- val-branch matrix, front-padded so its row tiles line up with output tiles ---
        vmat = node_val_mat.astype(jnp.float32).reshape(R_val, V)
        vmat = jnp.pad(vmat, ((pad_front, n_val_tiles * TR - pad_front - R_val), (0, 0)))

        kernel = functools.partial(_token_encoder_kernel,
                                   TR=TR, R_ne=R_ne, K_pad=K_pad, L_pad=L_pad)

        # VMEM budget sized to actual need plus headroom (resident tables +
        # double-buffered streamed blocks), instead of a blanket number.
        resident = (K_pad + V + L_pad) * D * 4 * 2
        streamed = TR * (2 + V + D) * 4 * 2 * 2
        vmem_limit = min(resident + streamed + (8 << 20), 128 << 20)

        out2d = pl.pallas_call(
            kernel,
            out_shape=jax.ShapeDtypeStruct((R, D), jnp.float32),
            grid_spec=pltpu.PrefetchScalarGridSpec(
                num_scalar_prefetch=0,
                grid=(n_tiles,),
                in_specs=[
                    # per-row gather index (clamped to last gather tile on val tiles)
                    pl.BlockSpec((TR, 1), lambda t: (jnp.minimum(t, n_ne_tiles - 1), 0)),
                    # per-row position id
                    pl.BlockSpec((TR, 1), lambda t: (t, 0)),
                    # resident tables (constant index -> fetched once, stay in VMEM)
                    pl.BlockSpec((K_pad, D), lambda t: (0, 0)),
                    pl.BlockSpec((V, D), lambda t: (0, 0)),
                    pl.BlockSpec((L_pad, D), lambda t: (0, 0)),
                    # val-branch rows, tile-aligned via front padding
                    pl.BlockSpec((TR, V), lambda t: (jnp.maximum(t - ne_full_tiles, 0), 0)),
                ],
                out_specs=pl.BlockSpec((TR, D), lambda t: (t, 0)),
            ),
            compiler_params=pltpu.CompilerParams(
                dimension_semantics=("parallel",),
                vmem_limit_bytes=int(vmem_limit),
            ),
        )(ne_idx, pos_id, ne_table, self.val_table, pos_table, vmat)

        return out2d.reshape(L_total, B, D)


# ----------------------------- Reference (pure JAX) --------------------------
def _reference(enc, node_idx, edge_idx, node_val_mat):
    L_n, B = node_idx.shape
    L_e, _ = edge_idx.shape
    ne = enc.node_table[node_idx] + enc.pos_node[:L_n][:, None, :]
    ee = enc.edge_table[edge_idx] + enc.pos_edge[:L_e][:, None, :]
    ve = (node_val_mat @ enc.val_table).reshape(L_n, B, enc.embed_dim)
    ve = ve + enc.pos_val[:L_n][:, None, :]
    return jnp.concatenate([ne, ee, ve], axis=0)


# ----------------------------- Main ------------------------------------------
if __name__ == "__main__":
    key = jax.random.PRNGKey(0)
    k_param, k_n, k_e, k_v = jax.random.split(key, 4)

    # Small synthetic "prog_dict" sizes; embed_dim = 128 for lane-dense stores.
    n_node_types, n_edge_types, n_token_vocab = 6, 5, 16
    embed_dim = 128
    L_n, L_e, B = 8, 6, 2

    enc = TokenEncoderPallas(n_node_types, n_edge_types, n_token_vocab,
                             embed_dim, max_len=50, key=k_param)

    node_idx = jax.random.randint(k_n, (L_n, B), 0, n_node_types, dtype=jnp.int32)
    edge_idx = jax.random.randint(k_e, (L_e, B), 0, n_edge_types, dtype=jnp.int32)
    # node_val_mat: (L_n*B, vocab) sparse-ish row-selection matrix (passed dense).
    val_sel = jax.random.randint(k_v, (L_n * B,), 0, n_token_vocab, dtype=jnp.int32)
    node_val_mat = jax.nn.one_hot(val_sel, n_token_vocab, dtype=jnp.float32)

    out = enc(node_idx, edge_idx, node_val_mat)
    out = jax.block_until_ready(out)

    ref = _reference(enc, node_idx, edge_idx, node_val_mat)
    assert out.shape == (2 * L_n + L_e, B, embed_dim), out.shape
    assert jnp.allclose(out, ref, atol=2e-5, rtol=2e-5), float(jnp.max(jnp.abs(out - ref)))

    print("KERNEL_OK")
</pallas_src>

<mosaic_0001>
module attributes {stable_mosaic.version = 11 : i64} {
  func.func @_token_encoder_kernel(%arg0: i32, %arg1: memref<16x1xi32, #tpu.memory_space<vmem>>, %arg2: memref<16x1xi32, #tpu.memory_space<vmem>>, %arg3: memref<16x128xf32, #tpu.memory_space<vmem>>, %arg4: memref<16x128xf32, #tpu.memory_space<vmem>>, %arg5: memref<24x128xf32, #tpu.memory_space<vmem>>, %arg6: memref<16x16xf32, #tpu.memory_space<vmem>>, %arg7: memref<16x128xf32, #tpu.memory_space<vmem>>) attributes {dimension_semantics = [#tpu.dimension_semantics<parallel>], iteration_bounds = array<i64: 3>, scalar_prefetch = 0 : i64, scratch_operands = 0 : i64, tpu.core_type = #tpu.core_type<tc>, window_params = [{transform_indices = @transform_0, window_bounds = array<i64: 16, 1>}, {transform_indices = @transform_1, window_bounds = array<i64: 16, 1>}, {pipeline_mode = #tpu.pipeline_mode<synchronous>, transform_indices = @transform_2, window_bounds = array<i64: 16, 128>}, {pipeline_mode = #tpu.pipeline_mode<synchronous>, transform_indices = @transform_3, window_bounds = array<i64: 16, 128>}, {pipeline_mode = #tpu.pipeline_mode<synchronous>, transform_indices = @transform_4, window_bounds = array<i64: 24, 128>}, {transform_indices = @transform_5, window_bounds = array<i64: 16, 16>}, {transform_indices = @transform_6, window_bounds = array<i64: 16, 128>}]} {
    %c16_i32 = arith.constant 16 : i32
    %0 = arith.muli %arg0, %c16_i32 : i32
    %c0 = arith.constant 0 : index
    %c0_0 = arith.constant 0 : index
    %1 = vector.load %arg2[%c0, %c0_0] : memref<16x1xi32, #tpu.memory_space<vmem>>, vector<16x1xi32>
    %2 = tpu.iota {dimensions = array<i32: 1>} : vector<16x24xi32>
    %3 = vector.broadcast %1 : vector<16x1xi32> to vector<16x24xi32>
    %4 = arith.cmpi eq, %3, %2 : vector<16x24xi32>
    %5 = arith.extui %4 : vector<16x24xi1> to vector<16x24xi32>
    %6 = arith.sitofp %5 : vector<16x24xi32> to vector<16x24xf32>
    %c0_1 = arith.constant 0 : index
    %c0_2 = arith.constant 0 : index
    %7 = vector.load %arg5[%c0_1, %c0_2] : memref<24x128xf32, #tpu.memory_space<vmem>>, vector<24x128xf32>
    %cst = arith.constant dense<0.000000e+00> : vector<16x128xf32>
    %8 = tpu.matmul %6, %7, %cst {dimension_numbers = #tpu.dot_dimension_numbers<[1], [0], [0], [1], [0, 0, 1, 1], [], []>} : vector<16x24xf32>, vector<24x128xf32>, vector<16x128xf32> -> vector<16x128xf32>
    %c16_i32_3 = arith.constant 16 : i32
    %9 = arith.addi %0, %c16_i32_3 : i32
    %c28_i32 = arith.constant 28 : i32
    %10 = arith.cmpi sle, %9, %c28_i32 : i32
    %c28_i32_4 = arith.constant 28 : i32
    %11 = arith.cmpi sge, %0, %c28_i32_4 : i32
    %12 = arith.extui %10 : i1 to i32
    %c0_i32 = arith.constant 0 : i32
    %13 = arith.cmpi ne, %12, %c0_i32 : i32
    scf.if %13 {
      %c0_8 = arith.constant 0 : index
      %c0_9 = arith.constant 0 : index
      %21 = vector.load %arg1[%c0_8, %c0_9] : memref<16x1xi32, #tpu.memory_space<vmem>>, vector<16x1xi32>
      %22 = tpu.iota {dimensions = array<i32: 1>} : vector<16x16xi32>
      %23 = vector.broadcast %21 : vector<16x1xi32> to vector<16x16xi32>
      %24 = arith.cmpi eq, %23, %22 : vector<16x16xi32>
      %25 = arith.extui %24 : vector<16x16xi1> to vector<16x16xi32>
      %26 = arith.sitofp %25 : vector<16x16xi32> to vector<16x16xf32>
      %c0_10 = arith.constant 0 : index
      %c0_11 = arith.constant 0 : index
      %27 = vector.load %arg3[%c0_10, %c0_11] : memref<16x128xf32, #tpu.memory_space<vmem>>, vector<16x128xf32>
      %cst_12 = arith.constant dense<0.000000e+00> : vector<16x128xf32>
      %28 = tpu.matmul %26, %27, %cst_12 {dimension_numbers = #tpu.dot_dimension_numbers<[1], [0], [0], [1], [0, 0, 1, 1], [], []>} : vector<16x16xf32>, vector<16x128xf32>, vector<16x128xf32> -> vector<16x128xf32>
      %29 = arith.addf %28, %8 : vector<16x128xf32>
      %c0_13 = arith.constant 0 : index
      %c0_14 = arith.constant 0 : index
      %30 = vector.load %arg7[%c0_13, %c0_14] : memref<16x128xf32, #tpu.memory_space<vmem>>, vector<16x128xf32>
      tpu.vector_store %arg7[%c0_13, %c0_14], %29 {strides = array<i32>} : memref<16x128xf32, #tpu.memory_space<vmem>>, vector<16x128xf32>,
    } else {
    }
    %14 = arith.extui %11 : i1 to i32
    %c0_i32_5 = arith.constant 0 : i32
    %15 = arith.cmpi ne, %14, %c0_i32_5 : i32
    scf.if %15 {
      %c0_8 = arith.constant 0 : index
      %c0_9 = arith.constant 0 : index
      %21 = vector.load %arg6[%c0_8, %c0_9] : memref<16x16xf32, #tpu.memory_space<vmem>>, vector<16x16xf32>
      %c0_10 = arith.constant 0 : index
      %c0_11 = arith.constant 0 : index
      %22 = vector.load %arg4[%c0_10, %c0_11] : memref<16x128xf32, #tpu.memory_space<vmem>>, vector<16x128xf32>
      %cst_12 = arith.constant dense<0.000000e+00> : vector<16x128xf32>
      %23 = tpu.matmul %21, %22, %cst_12 {dimension_numbers = #tpu.dot_dimension_numbers<[1], [0], [0], [1], [0, 0, 1, 1], [], []>} : vector<16x16xf32>, vector<16x128xf32>, vector<16x128xf32> -> vector<16x128xf32>
      %24 = arith.addf %23, %8 : vector<16x128xf32>
      %c0_13 = arith.constant 0 : index
      %c0_14 = arith.constant 0 : index
      %25 = vector.load %arg7[%c0_13, %c0_14] : memref<16x128xf32, #tpu.memory_space<vmem>>, vector<16x128xf32>
      tpu.vector_store %arg7[%c0_13, %c0_14], %24 {strides = array<i32>} : memref<16x128xf32, #tpu.memory_space<vmem>>, vector<16x128xf32>,
    } else {
    }
    %true = arith.constant true
    %16 = arith.xori %10, %true : i1
    %true_6 = arith.constant true
    %17 = arith.xori %11, %true_6 : i1
    %18 = arith.andi %16, %17 : i1
    %19 = arith.extui %18 : i1 to i32
    %c0_i32_7 = arith.constant 0 : i32
    %20 = arith.cmpi ne, %19, %c0_i32_7 : i32
    scf.if %20 {
      %21 = tpu.iota {dimensions = array<i32: 0>} : vector<16x1xi32>
      %22 = vector.broadcast %0 : i32 to vector<16x1xi32>
      %23 = arith.addi %22, %21 : vector<16x1xi32>
      %c28_i32_8 = arith.constant 28 : i32
      %24 = vector.broadcast %c28_i32_8 : i32 to vector<16x1xi32>
      %25 = arith.cmpi slt, %23, %24 : vector<16x1xi32>
      %c0_9 = arith.constant 0 : index
      %c0_10 = arith.constant 0 : index
      %26 = vector.load %arg1[%c0_9, %c0_10] : memref<16x1xi32, #tpu.memory_space<vmem>>, vector<16x1xi32>
      %27 = tpu.iota {dimensions = array<i32: 1>} : vector<16x16xi32>
      %28 = vector.broadcast %26 : vector<16x1xi32> to vector<16x16xi32>
      %29 = arith.cmpi eq, %28, %27 : vector<16x16xi32>
      %30 = arith.extui %29 : vector<16x16xi1> to vector<16x16xi32>
      %31 = arith.sitofp %30 : vector<16x16xi32> to vector<16x16xf32>
      %c0_11 = arith.constant 0 : index
      %c0_12 = arith.constant 0 : index
      %32 = vector.load %arg3[%c0_11, %c0_12] : memref<16x128xf32, #tpu.memory_space<vmem>>, vector<16x128xf32>
      %cst_13 = arith.constant dense<0.000000e+00> : vector<16x128xf32>
      %33 = tpu.matmul %31, %32, %cst_13 {dimension_numbers = #tpu.dot_dimension_numbers<[1], [0], [0], [1], [0, 0, 1, 1], [], []>} : vector<16x16xf32>, vector<16x128xf32>, vector<16x128xf32> -> vector<16x128xf32>
      %c0_14 = arith.constant 0 : index
      %c0_15 = arith.constant 0 : index
      %34 = vector.load %arg6[%c0_14, %c0_15] : memref<16x16xf32, #tpu.memory_space<vmem>>, vector<16x16xf32>
      %c0_16 = arith.constant 0 : index
      %c0_17 = arith.constant 0 : index
      %35 = vector.load %arg4[%c0_16, %c0_17] : memref<16x128xf32, #tpu.memory_space<vmem>>, vector<16x128xf32>
      %cst_18 = arith.constant dense<0.000000e+00> : vector<16x128xf32>
      %36 = tpu.matmul %34, %35, %cst_18 {dimension_numbers = #tpu.dot_dimension_numbers<[1], [0], [0], [1], [0, 0, 1, 1], [], []>} : vector<16x16xf32>, vector<16x128xf32>, vector<16x128xf32> -> vector<16x128xf32>
      %37 = vector.shape_cast %25 : vector<16x1xi1> to vector<16x1xi1>
      %38 = vector.broadcast %37 : vector<16x1xi1> to vector<16x128xi1>
      %39 = arith.select %38, %33, %36 : vector<16x128xi1>, vector<16x128xf32>
      %40 = arith.addf %39, %8 : vector<16x128xf32>
      %c0_19 = arith.constant 0 : index
      %c0_20 = arith.constant 0 : index
      %41 = vector.load %arg7[%c0_19, %c0_20] : memref<16x128xf32, #tpu.memory_space<vmem>>, vector<16x128xf32>
      tpu.vector_store %arg7[%c0_19, %c0_20], %40 {strides = array<i32>} : memref<16x128xf32, #tpu.memory_space<vmem>>, vector<16x128xf32>,
    } else {
    }
    return
  }
  func.func @transform_0(%arg0: i32) -> (i32, i32) {
    %c1_i32 = arith.constant 1 : i32
    %0 = arith.minsi %arg0, %c1_i32 : i32
    %c0_i32 = arith.constant 0 : i32
    %c0_i32_0 = arith.constant 0 : i32
    return %0, %c0_i32 : i32, i32
  }
  func.func @transform_1(%arg0: i32) -> (i32, i32) {
    %c0_i32 = arith.constant 0 : i32
    %c0_i32_0 = arith.constant 0 : i32
    return %arg0, %c0_i32 : i32, i32
  }
  func.func @transform_2(%arg0: i32) -> (i32, i32) {
    %c0_i32 = arith.constant 0 : i32
    %c0_i32_0 = arith.constant 0 : i32
    %c0_i32_1 = arith.constant 0 : i32
    return %c0_i32, %c0_i32_0 : i32, i32
  }
  func.func @transform_3(%arg0: i32) -> (i32, i32) {
    %c0_i32 = arith.constant 0 : i32
    %c0_i32_0 = arith.constant 0 : i32
    %c0_i32_1 = arith.constant 0 : i32
    return %c0_i32, %c0_i32_0 : i32, i32
  }
  func.func @transform_4(%arg0: i32) -> (i32, i32) {
    %c0_i32 = arith.constant 0 : i32
    %c0_i32_0 = arith.constant 0 : i32
    %c0_i32_1 = arith.constant 0 : i32
    return %c0_i32, %c0_i32_0 : i32, i32
  }
  func.func @transform_5(%arg0: i32) -> (i32, i32) {
    %c1_i32 = arith.constant 1 : i32
    %0 = arith.subi %arg0, %c1_i32 : i32
    %c0_i32 = arith.constant 0 : i32
    %1 = arith.maxsi %0, %c0_i32 : i32
    %c0_i32_0 = arith.constant 0 : i32
    %c0_i32_1 = arith.constant 0 : i32
    return %1, %c0_i32_0 : i32, i32
  }
  func.func @transform_6(%arg0: i32) -> (i32, i32) {
    %c0_i32 = arith.constant 0 : i32
    %c0_i32_0 = arith.constant 0 : i32
    return %arg0, %c0_i32 : i32, i32
  }
}

</mosaic_0001>

<llo_original>
// kernel: tpu_custom_call.1
$region0: #{tpu_custom_call.1}
  #allocation0 [shape = 'u32[]', space=smem, size = 0x4, offset = 0x4, fixed_abs, tag = 'smem constant byte address 0x4 - core index']
  #allocation1 [shape = 'u32[144,128]{1,0:T(1,128)}', space=vmem, size = 0x12000, scoped, tag = 'internal scratch']
  %s0 = inlined_call_operand.vmem [shape: s32[32,1], index: 0, kind: input, shape index: {}]
  %s1 = inlined_call_operand.vmem [shape: s32[48,1], index: 1, kind: input, shape index: {}]
  %s2 = inlined_call_operand.vmem [shape: f32[16,128], index: 2, kind: input, shape index: {}]
  %s3 = inlined_call_operand.vmem [shape: f32[16,128], index: 3, kind: input, shape index: {}]
  %s4 = inlined_call_operand.vmem [shape: f32[24,128], index: 4, kind: input, shape index: {}]
  %s5 = inlined_call_operand.vmem [shape: f32[32,16], index: 5, kind: input, shape index: {}]
  %s6 = inlined_call_operand.hbm [shape: f32[44,128], index: 6, kind: output, shape index: {}]
  %s7 = sld [smem:[#allocation0]]
  $region69: #{tpu_custom_call.1} parent=0
    _
  %s9 = ssub.s32 1, %s7
  %s10 = scalar_select 0, %s9, %s7
  $region1: #{tpu_custom_call.1} parent=0
    #allocation2 [shape = 'u8[16384]{0}', space=vmem, size = 0x4000, scoped, tag = 'output window, operand 0']
    #allocation3 [shape = 's32[2]{0}', space=sflag, size = 0x8, scoped, tag = 'scoped memory for tpu_custom_call.1']
    %11 = vsyncpa [#allocation3], 0
    %s12 = scalar_lea.sflag [#allocation3], 1
    %13 = vsyncpa %s12, 0
    loop: start=0, step=1, limit=5
    $region2: #{tpu_custom_call.1} parent=1 // loop_pre_header
      _
    $region3: #{tpu_custom_call.1} parent=1 // loop_header
      %s15 = sphi 0, %s19
      %p16 = scmp.ge.s32.totalorder %s15, 5
      %s29 = sphi 0, %s31
      %s32 = sphi 0, %s29
      %s33 = sphi 0, %s32
      %s49 = sphi 0, %s33
      %s55 = sphi 0, %s57
      %s58 = sphi 0, %s55
      %s59 = sphi 0, %s58
      %s75 = sphi 0, %s59
      %s79 = sphi 0, %s79
      %s81 = sphi 0, %s79
      %s82 = sphi 0, %s81
      %s96 = sphi 0, %s82
      %s100 = sphi 0, %s100
      %s102 = sphi 0, %s100
      %s103 = sphi 0, %s102
      %s117 = sphi 0, %s103
      %s121 = sphi 0, %s121
      %s123 = sphi 0, %s121
      %s124 = sphi 0, %s123
      %s138 = sphi 0, %s124
      %s150 = sphi 0, %s152
      %s153 = sphi 0, %s150
      %s154 = sphi 0, %s153
      %s170 = sphi 0, %s154
      %s176 = sphi 0, %s178
      %s179 = sphi 0, %s176
      %s180 = sphi 0, %s179
      %s196 = sphi 0, %s180
    $region4: #{tpu_custom_call.1} parent=1 // loop_header_branch
      %18 = sbr.rel (%p16) target = $region8
    $region5: #{tpu_custom_call.1} parent=1 // loop_body
      %s20 = ssub.s32 %s15, 1
      %s21 = ssub.s32 %s15, 2
      %s22 = sadd.s32 %s15, 1
      %p23 = scmp.lt.s32.totalorder %s15, 1
      %s24 = scalar_select %p23, %s15, 1
      %p25 = scmp.lt.s32.totalorder %s22, 1
      %s26 = scalar_select %p25, %s22, 1
      %s27 = ssub.s32 %s24, %s26
      %p28 = scmp.eq.s32.totalorder %s27, 0
      %s30 = sadd.s32 %s29, 1
      %s31 = scalar_select %p28, %s29, %s30
      %p34 = pneg %p28
      %p35 = scmp.eq.s32.totalorder %s15, 2
      %p36 = por %p34, %p35
      %p37 = scmp.ne.s32.totalorder %s29, %s32
      %p38 = scmp.eq.s32.totalorder %s15, 0
      %p39 = por %p37, %p38
      %p40 = scmp.ne.s32.totalorder %s29, %s32
      %p41 = scmp.eq.s32.totalorder %s20, 2
      %p42 = por %p40, %p41
      %p43 = scmp.ne.s32.totalorder %s32, %s33
      %p44 = scmp.eq.s32.totalorder %s20, 0
      %p45 = por %p43, %p44
      %p46 = scmp.ne.s32.totalorder %s32, %s33
      %p47 = scmp.eq.s32.totalorder %s21, 2
      %p48 = por %p46, %p47
      %p50 = scmp.ne.s32.totalorder %s33, %s49
      %p51 = scmp.eq.s32.totalorder %s21, 0
      %p52 = por %p50, %p51
      %s53 = ssub.s32 %s15, %s22
      %p54 = scmp.eq.s32.totalorder %s53, 0
      %s56 = sadd.s32 %s55, 1
      %s57 = scalar_select %p54, %s55, %s56
      %p60 = pneg %p54
      %p61 = scmp.eq.s32.totalorder %s15, 2
      %p62 = por %p60, %p61
      %p63 = scmp.ne.s32.totalorder %s55, %s58
      %p64 = scmp.eq.s32.totalorder %s15, 0
      %p65 = por %p63, %p64
      %p66 = scmp.ne.s32.totalorder %s55, %s58
      %p67 = scmp.eq.s32.totalorder %s20, 2
      %p68 = por %p66, %p67
      %p69 = scmp.ne.s32.totalorder %s58, %s59
      %p70 = scmp.eq.s32.totalorder %s20, 0
      %p71 = por %p69, %p70
      %p72 = scmp.ne.s32.totalorder %s58, %s59
      %p73 = scmp.eq.s32.totalorder %s21, 2
      %p74 = por %p72, %p73
      %p76 = scmp.ne.s32.totalorder %s59, %s75
      %p77 = scmp.eq.s32.totalorder %s21, 0
      %p78 = por %p76, %p77
      %s80 = sadd.s32 %s79, 1
      %p83 = scmp.eq.s32.totalorder %s15, 2
      %p84 = scmp.ne.s32.totalorder %s79, %s81
      %p85 = scmp.eq.s32.totalorder %s15, 0
      %p86 = por %p84, %p85
      %p87 = scmp.ne.s32.totalorder %s79, %s81
      %p88 = scmp.eq.s32.totalorder %s20, 2
      %p89 = por %p87, %p88
      %p90 = scmp.ne.s32.totalorder %s81, %s82
      %p91 = scmp.eq.s32.totalorder %s20, 0
      %p92 = por %p90, %p91
      %p93 = scmp.ne.s32.totalorder %s81, %s82
      %p94 = scmp.eq.s32.totalorder %s21, 2
      %p95 = por %p93, %p94
      %p97 = scmp.ne.s32.totalorder %s82, %s96
      %p98 = scmp.eq.s32.totalorder %s21, 0
      %p99 = por %p97, %p98
      %s101 = sadd.s32 %s100, 1
      %p104 = scmp.eq.s32.totalorder %s15, 2
      %p105 = scmp.ne.s32.totalorder %s100, %s102
      %p106 = scmp.eq.s32.totalorder %s15, 0
      %p107 = por %p105, %p106
      %p108 = scmp.ne.s32.totalorder %s100, %s102
      %p109 = scmp.eq.s32.totalorder %s20, 2
      %p110 = por %p108, %p109
      %p111 = scmp.ne.s32.totalorder %s102, %s103
      %p112 = scmp.eq.s32.totalorder %s20, 0
      %p113 = por %p111, %p112
      %p114 = scmp.ne.s32.totalorder %s102, %s103
      %p115 = scmp.eq.s32.totalorder %s21, 2
      %p116 = por %p114, %p115
      %p118 = scmp.ne.s32.totalorder %s103, %s117
      %p119 = scmp.eq.s32.totalorder %s21, 0
      %p120 = por %p118, %p119
      %s122 = sadd.s32 %s121, 1
      %p125 = scmp.eq.s32.totalorder %s15, 2
      %p126 = scmp.ne.s32.totalorder %s121, %s123
      %p127 = scmp.eq.s32.totalorder %s15, 0
      %p128 = por %p126, %p127
      %p129 = scmp.ne.s32.totalorder %s121, %s123
      %p130 = scmp.eq.s32.totalorder %s20, 2
      %p131 = por %p129, %p130
      %p132 = scmp.ne.s32.totalorder %s123, %s124
      %p133 = scmp.eq.s32.totalorder %s20, 0
      %p134 = por %p132, %p133
      %p135 = scmp.ne.s32.totalorder %s123, %s124
      %p136 = scmp.eq.s32.totalorder %s21, 2
      %p137 = por %p135, %p136
      %p139 = scmp.ne.s32.totalorder %s124, %s138
      %p140 = scmp.eq.s32.totalorder %s21, 0
      %p141 = por %p139, %p140
      %s142 = ssub.s32 %s15, 1
      %p143 = scmp.gt.s32.totalorder %s142, 0
      %s144 = scalar_select %p143, %s142, 0
      %s145 = ssub.s32 %s22, 1
      %p146 = scmp.gt.s32.totalorder %s145, 0
      %s147 = scalar_select %p146, %s145, 0
      %s148 = ssub.s32 %s144, %s147
      %p149 = scmp.eq.s32.totalorder %s148, 0
      %s151 = sadd.s32 %s150, 1
      %s152 = scalar_select %p149, %s150, %s151
      %p155 = pneg %p149
      %p156 = scmp.eq.s32.totalorder %s15, 2
      %p157 = por %p155, %p156
      %p158 = scmp.ne.s32.totalorder %s150, %s153
      %p159 = scmp.eq.s32.totalorder %s15, 0
      %p160 = por %p158, %p159
      %p161 = scmp.ne.s32.totalorder %s150, %s153
      %p162 = scmp.eq.s32.totalorder %s20, 2
      %p163 = por %p161, %p162
      %p164 = scmp.ne.s32.totalorder %s153, %s154
      %p165 = scmp.eq.s32.totalorder %s20, 0
      %p166 = por %p164, %p165
      %p167 = scmp.ne.s32.totalorder %s153, %s154
      %p168 = scmp.eq.s32.totalorder %s21, 2
      %p169 = por %p167, %p168
      %p171 = scmp.ne.s32.totalorder %s154, %s170
      %p172 = scmp.eq.s32.totalorder %s21, 0
      %p173 = por %p171, %p172
      %s174 = ssub.s32 %s15, %s22
      %p175 = scmp.eq.s32.totalorder %s174, 0
      %s177 = sadd.s32 %s176, 1
      %s178 = scalar_select %p175, %s176, %s177
      %p181 = pneg %p175
      %p182 = scmp.eq.s32.totalorder %s15, 2
      %p183 = por %p181, %p182
      %p184 = scmp.ne.s32.totalorder %s176, %s179
      %p185 = scmp.eq.s32.totalorder %s15, 0
      %p186 = por %p184, %p185
      %p187 = scmp.ne.s32.totalorder %s176, %s179
      %p188 = scmp.eq.s32.totalorder %s20, 2
      %p189 = por %p187, %p188
      %p190 = scmp.ne.s32.totalorder %s179, %s180
      %p191 = scmp.eq.s32.totalorder %s20, 0
      %p192 = por %p190, %p191
      %p193 = scmp.ne.s32.totalorder %s179, %s180
      %p194 = scmp.eq.s32.totalorder %s21, 2
      %p195 = por %p193, %p194
      %p197 = scmp.ne.s32.totalorder %s180, %s196
      %p198 = scmp.eq.s32.totalorder %s21, 0
      %p199 = por %p197, %p198
      %p200 = scmp.le.s32.totalorder 1, %s15
      %p201 = scmp.lt.s32.totalorder %s15, 4
      %p202 = pnand %p200, %p201
      %p203 = pneg %p202
      // Predicated region
      $region9: #{tpu_custom_call.1} parent=5 // pred_check
        _
      $region10: #{tpu_custom_call.1} parent=5 // pred_check_branch
        %205 = sbr.rel (%p202) target = $region12
      $region11: #{tpu_custom_call.1} parent=5 // pred_region
        %s206 = ssub.s32 %s15, 1
        // Predicated region
        $region13: #{tpu_custom_call.1} parent=11 // pred_check
          %p207 = pneg %p92
        $region14: #{tpu_custom_call.1} parent=11 // pred_check_branch
          %209 = sbr.rel (%p207) target = $region16
        $region15: #{tpu_custom_call.1} parent=11 // pred_region
          _
        $region16: #{tpu_custom_call.1} parent=11 // pred_fallthru
          _
        // Predicated region
        $region17: #{tpu_custom_call.1} parent=11 // pred_check
          %p210 = pneg %p113
        $region18: #{tpu_custom_call.1} parent=11 // pred_check_branch
          %212 = sbr.rel (%p210) target = $region20
        $region19: #{tpu_custom_call.1} parent=11 // pred_region
          _
        $region20: #{tpu_custom_call.1} parent=11 // pred_fallthru
          _
        // Predicated region
        $region21: #{tpu_custom_call.1} parent=11 // pred_check
          %p213 = pneg %p134
        $region22: #{tpu_custom_call.1} parent=11 // pred_check_branch
          %215 = sbr.rel (%p213) target = $region24
        $region23: #{tpu_custom_call.1} parent=11 // pred_region
          _
        $region24: #{tpu_custom_call.1} parent=11 // pred_fallthru
          _
      $region12: #{tpu_custom_call.1} parent=5 // pred_fallthru
        _
      %p216 = scmp.lt.s32.totalorder %s15, 3
      // Predicated region
      $region25: #{tpu_custom_call.1} parent=5 // pred_check
        %p217 = pneg %p216
      $region26: #{tpu_custom_call.1} parent=5 // pred_check_branch
        %219 = sbr.rel (%p217) target = $region28
      $region27: #{tpu_custom_call.1} parent=5 // pred_region
        // Predicated region
        $region29: #{tpu_custom_call.1} parent=27 // pred_check
          %p220 = pneg %p39
        $region30: #{tpu_custom_call.1} parent=27 // pred_check_branch
          %222 = sbr.rel (%p220) target = $region32
        $region31: #{tpu_custom_call.1} parent=27 // pred_region
          %p223 = scmp.lt.s32.totalorder %s15, 1
          %s224 = scalar_select %p223, %s15, 1
          %s225 = smul.u32 2, %s224
          %p226 = scmp.lt.s32.totalorder %s225, 3
          %s227 = scalar_select %p226, %s225, 3
          %s228 = smul.addr %s227, 8
          %s229 = scalar_lea.vmem %s0, %s228
          %p230 = scmp.lt.s32.totalorder %s15, 1
          %s231 = scalar_select %p230, %s15, 1
          %s232 = smul.u32 2, %s231
        $region32: #{tpu_custom_call.1} parent=27 // pred_fallthru
          _
        // Predicated region
        $region33: #{tpu_custom_call.1} parent=27 // pred_check
          %p233 = pneg %p65
        $region34: #{tpu_custom_call.1} parent=27 // pred_check_branch
          %235 = sbr.rel (%p233) target = $region36
        $region35: #{tpu_custom_call.1} parent=27 // pred_region
          %s236 = smul.u32 2, %s15
          %p237 = scmp.lt.s32.totalorder %s236, 5
          %s238 = scalar_select %p237, %s236, 5
          %s239 = smul.addr %s238, 8
          %s240 = scalar_lea.vmem %s1, %s239
          %s241 = smul.u32 2, %s15
        $region36: #{tpu_custom_call.1} parent=27 // pred_fallthru
          _
        // Predicated region
        $region37: #{tpu_custom_call.1} parent=27 // pred_check
          %p242 = pneg %p160
        $region38: #{tpu_custom_call.1} parent=27 // pred_check_branch
          %244 = sbr.rel (%p242) target = $region40
        $region39: #{tpu_custom_call.1} parent=27 // pred_region
          %s245 = ssub.s32 %s15, 1
          %p246 = scmp.gt.s32.totalorder %s245, 0
          %s247 = scalar_select %p246, %s245, 0
          %s248 = smul.u32 2, %s247
          %p249 = scmp.lt.s32.totalorder %s248, 3
          %s250 = scalar_select %p249, %s248, 3
          %s251 = smul.addr %s250, 8
          %s252 = scalar_lea.vmem %s5, %s251
          %s253 = ssub.s32 %s15, 1
          %p254 = scmp.gt.s32.totalorder %s253, 0
          %s255 = scalar_select %p254, %s253, 0
          %s256 = smul.u32 2, %s255
        $region40: #{tpu_custom_call.1} parent=27 // pred_fallthru
          _
      $region28: #{tpu_custom_call.1} parent=5 // pred_fallthru
        _
      %p257 = scmp.le.s32.totalorder 1, %s15
      %p258 = scmp.lt.s32.totalorder %s15, 4
      %p259 = pnand %p257, %p258
      %p260 = pneg %p259
      // Predicated region
      $region41: #{tpu_custom_call.1} parent=5 // pred_check
        _
      $region42: #{tpu_custom_call.1} parent=5 // pred_check_branch
        %262 = sbr.rel (%p259) target = $region44
      $region43: #{tpu_custom_call.1} parent=5 // pred_region
        %s263 = ssub.s32 %s15, 1
        %p264 = scmp.lt.s32.totalorder %s20, 1
        %s265 = scalar_select %p264, %s20, 1
        %s266 = smul.u32 2, %s265
        %p267 = scmp.lt.s32.totalorder %s266, 3
        %s268 = scalar_select %p267, %s266, 3
        %s269 = smul.addr %s268, 8
        %s270 = scalar_lea.vmem %s0, %s269
        %p271 = pneg %p45
        %p272 = pneg %p42
        %s273 = smul.u32 2, %s20
        %p274 = scmp.lt.s32.totalorder %s273, 5
        %s275 = scalar_select %p274, %s273, 5
        %s276 = smul.addr %s275, 8
        %s277 = scalar_lea.vmem %s1, %s276
        %p278 = pneg %p71
        %p279 = pneg %p68
        %p280 = pneg %p92
        %p281 = pneg %p89
        %p282 = pneg %p113
        %p283 = pneg %p110
        %p284 = pneg %p134
        %p285 = pneg %p131
        %s286 = ssub.s32 %s20, 1
        %p287 = scmp.gt.s32.totalorder %s286, 0
        %s288 = scalar_select %p287, %s286, 0
        %s289 = smul.u32 2, %s288
        %p290 = scmp.lt.s32.totalorder %s289, 3
        %s291 = scalar_select %p290, %s289, 3
        %s292 = smul.addr %s291, 8
        %s293 = scalar_lea.vmem %s5, %s292
        %p294 = pneg %p166
        %p295 = pneg %p163
        %p296 = pneg %p192
        %p297 = pneg %p189
        %s298 = sand.u32 %s179, 1
        %s299 = scalar_lea.sflag [#allocation3], %s298
        %s300 = sand.u32 %s179, 1
        %s301 = smul.addr %s300, 16
        %s302 = scalar_lea.vmem [#allocation2], %s301
        %p303 = scmp.lt.s32.totalorder %s20, 1
        %s304 = scalar_select %p303, %s20, 1
        %s305 = smul.u32 2, %s304
        %p306 = scmp.lt.s32.totalorder %s305, 3
        %s307 = scalar_select %p306, %s305, 3
        %s308 = smul.addr %s307, 8
        %s309 = scalar_lea.vmem %s0, %s308
        %p310 = scmp.lt.s32.totalorder %s20, 1
        %s311 = scalar_select %p310, %s20, 1
        %s312 = smul.u32 2, %s311
        %s313 = smul.u32 2, %s20
        %p314 = scmp.lt.s32.totalorder %s313, 5
        %s315 = scalar_select %p314, %s313, 5
        %s316 = smul.addr %s315, 8
        %s317 = scalar_lea.vmem %s1, %s316
        %s318 = smul.u32 2, %s20
        %s319 = ssub.s32 %s20, 1
        %p320 = scmp.gt.s32.totalorder %s319, 0
        %s321 = scalar_select %p320, %s319, 0
        %s322 = smul.u32 2, %s321
        %p323 = scmp.lt.s32.totalorder %s322, 3
        %s324 = scalar_select %p323, %s322, 3
        %s325 = smul.addr %s324, 8
        %s326 = scalar_lea.vmem %s5, %s325
        %s327 = ssub.s32 %s20, 1
        %p328 = scmp.gt.s32.totalorder %s327, 0
        %s329 = scalar_select %p328, %s327, 0
        %s330 = smul.u32 2, %s329
        %s331 = smul.u32 2, %s20
        %s332 = smul.u32 %s20, 16
        %v333 = vld [vmem:[%s317] sm:$0xff]
        %v334 = vld [vmem:[%s317 + $0x8] sm:$0xff]
        %v335 = vlaneseq
        %v336 = vand.u32 %v335, 127
        %337 = vset.pattern.permute.xlu0 0
        %338 = vperm.xlu0 %337, %v333
        %v339 = vpop.permute.xlu0 %338
        %340 = vset.pattern.permute.xlu0 0
        %341 = vperm.xlu0 %340, %v334
        %v342 = vpop.permute.xlu0 %341
        %vm343 = vcmp.eq.s32.totalorder %v339, %v336
        %vm344 = vcmp.eq.s32.totalorder %v342, %v336
        %v345 = vsel %vm343, 1, 0
        %v346 = vsel %vm344, 1, 0
        %v347 = vcvt.s32.f32 %v345
        %v348 = vcvt.s32.f32 %v346
        %v349 = vld [vmem:[%s4] sm:$0xff]
        %v350 = vld [vmem:[%s4 + $0x8] sm:$0xff]
        %v351 = vld [vmem:[%s4 + $0x10] sm:$0xff]
        %vm352 = vcmask 195584
        %v354 = vsel %vm352, %v347, 0
        %v357 = vsel %vm352, %v348, 0
        %359 = vmatprep.subr.mxu0 0.0
        %360 = vmatpush1.msra.mxu0 %v349
        %361 = vmatprep.subr.mxu0 0.0
        %362 = vmatpush1.msra.mxu0 %v350
        %363 = vmatprep.subr.mxu0 0.0
        %364 = vmatpush1.msra.mxu0 %v351
        %365 = vmatprep.subr.mxu0 0.0
        %366 = vmatpush1.msra.mxu0 0.0
        %367 = vmatprep.subr.mxu0 0.0
        %368 = vmatpush1.msra.mxu0 0.0
        %369 = vmatprep.subr.mxu0 0.0
        %370 = vmatpush1.msra.mxu0 0.0
        %371 = vmatprep.subr.mxu0 0.0
        %372 = vmatpush1.msra.mxu0 0.0
        %373 = vmatprep.subr.mxu0 0.0
        %374 = vmatpush1.msra.mxu0 0.0
        %375 = vmatprep.subr.mxu0 0.0
        %376 = vmatpush1.msra.mxu0 0.0
        %377 = vmatprep.subr.mxu0 0.0
        %378 = vmatpush1.msra.mxu0 0.0
        %379 = vmatprep.subr.mxu0 0.0
        %380 = vmatpush1.msra.mxu0 0.0
        %381 = vmatprep.subr.mxu0 0.0
        %382 = vmatpush1.msra.mxu0 0.0
        %383 = vmatprep.subr.mxu0 0.0
        %384 = vmatpush1.msra.mxu0 0.0
        %385 = vmatprep.subr.mxu0 0.0
        %386 = vmatpush1.msra.mxu0 0.0
        %387 = vmatprep.subr.mxu0 0.0
        %388 = vmatpush1.msra.mxu0 0.0
        %389 = vmatprep.subr.mxu0 0.0
        %390 = vmatpush1.msra.mxu0 0.0
        %391 = vmatprep.subr.mxu0 0.0
        %392 = vmatpush1.msra.mxu0 0.0
        %393 = vmatprep.subr.mxu0 0.0
        %394 = vmatpush1.msra.mxu0 0.0
        %395 = vmatprep.subr.mxu0 0.0
        %396 = vmatpush1.msra.mxu0 0.0
        %397 = vmatprep.subr.mxu0 0.0
        %398 = vmatpush1.msra.mxu0 0.0
        %399 = vmatprep.subr.mxu0 0.0
        %400 = vmatpush1.msra.mxu0 0.0
        %401 = vmatprep.subr.mxu0 0.0
        %402 = vmatpush1.msra.mxu0 0.0
        %403 = vmatprep.subr.mxu0 0.0
        %404 = vmatpush1.msra.mxu0 0.0
        %405 = vmatprep.subr.mxu0 0.0
        %406 = vmatpush1.msra.mxu0 0.0
        %407 = vmatprep.subr.mxu0 0.0
        %408 = vmatpush1.msra.mxu0 0.0
        %409 = vmatprep.subr.mxu0 0.0
        %410 = vmatpush1.msra.mxu0 0.0
        %411 = vmatprep.subr.mxu0 0.0
        %412 = vmatpush1.msra.mxu0 0.0
        %413 = vmatprep.subr.mxu0 0.0
        %414 = vmatpush1.msra.mxu0 0.0
        %415 = vmatprep.subr.mxu0 0.0
        %416 = vmatpush1.msra.mxu0 0.0
        %417 = vmatprep.subr.mxu0 0.0
        %418 = vmatpush1.msra.mxu0 0.0
        %419 = vmatprep.subr.mxu0 0.0
        %420 = vmatpush1.msra.mxu0 0.0
        %421 = vmatprep.subr.mxu0 0.0
        %422 = vmatpush1.msra.mxu0 0.0
        %423 = vmatprep.mubr.f32.mxu0 0.0
        %424 = vmatmul.mubr.f32.gmra.mrb[0].mxu0 %v354
        %v425 = vpop.f32.mrb[0].mxu0
        %v426 = vadd.f32 0.0, %v425
        %v427 = vpop.f32.mrb[0].mxu0
        %428 = vmatprep.mubr.f32.mxu0 0.0
        %429 = vmatmul.mubr.f32.gmra.mrb[0].mxu0 %v357
        %v430 = vpop.f32.mrb[0].mxu0
        %v431 = vadd.f32 0.0, %v430
        %v432 = vpop.f32.mrb[0].mxu0
        %433 = vdwg.mxu0
        %s434 = sadd.s32 %s332, 16
        %p435 = scmp.le.s32.totalorder %s434, 28
        %p436 = scmp.ge.s32.totalorder %s332, 28
        // Predicated region
        $region45: #{tpu_custom_call.1} parent=43 // pred_check
          %p437 = pneg %p435
        $region46: #{tpu_custom_call.1} parent=43 // pred_check_branch
          %439 = sbr.rel (%p437) target = $region48
        $region47: #{tpu_custom_call.1} parent=43 // pred_region
          %v440 = vld [vmem:[%s309] sm:$0xff]
          %v441 = vld [vmem:[%s309 + $0x8] sm:$0xff]
          %442 = vset.pattern.permute.xlu0 0
          %443 = vperm.xlu0 %442, %v440
          %v444 = vpop.permute.xlu0 %443
          %445 = vset.pattern.permute.xlu0 0
          %446 = vperm.xlu0 %445, %v441
          %v447 = vpop.permute.xlu0 %446
          %vm448 = vcmp.eq.s32.totalorder %v444, %v336
          %vm449 = vcmp.eq.s32.totalorder %v447, %v336
          %v450 = vsel %vm448, 1, 0
          %v451 = vsel %vm449, 1, 0
          %v452 = vcvt.s32.f32 %v450
          %v453 = vcvt.s32.f32 %v451
          %v454 = vld [vmem:[%s2] sm:$0xff]
          %v455 = vld [vmem:[%s2 + $0x8] sm:$0xff]
          %vm456 = vcmask 130048
          %v458 = vsel %vm456, %v452, 0
          %v461 = vsel %vm456, %v453, 0
          %463 = vmatprep.subr.mxu0 0.0
          %464 = vmatpush1.msra.mxu0 %v454
          %465 = vmatprep.subr.mxu0 0.0
          %466 = vmatpush1.msra.mxu0 %v455
          %467 = vmatprep.subr.mxu0 0.0
          %468 = vmatpush1.msra.mxu0 0.0
          %469 = vmatprep.subr.mxu0 0.0
          %470 = vmatpush1.msra.mxu0 0.0
          %471 = vmatprep.subr.mxu0 0.0
          %472 = vmatpush1.msra.mxu0 0.0
          %473 = vmatprep.subr.mxu0 0.0
          %474 = vmatpush1.msra.mxu0 0.0
          %475 = vmatprep.subr.mxu0 0.0
          %476 = vmatpush1.msra.mxu0 0.0
          %477 = vmatprep.subr.mxu0 0.0
          %478 = vmatpush1.msra.mxu0 0.0
          %479 = vmatprep.subr.mxu0 0.0
          %480 = vmatpush1.msra.mxu0 0.0
          %481 = vmatprep.subr.mxu0 0.0
          %482 = vmatpush1.msra.mxu0 0.0
          %483 = vmatprep.subr.mxu0 0.0
          %484 = vmatpush1.msra.mxu0 0.0
          %485 = vmatprep.subr.mxu0 0.0
          %486 = vmatpush1.msra.mxu0 0.0
          %487 = vmatprep.subr.mxu0 0.0
          %488 = vmatpush1.msra.mxu0 0.0
          %489 = vmatprep.subr.mxu0 0.0
          %490 = vmatpush1.msra.mxu0 0.0
          %491 = vmatprep.subr.mxu0 0.0
          %492 = vmatpush1.msra.mxu0 0.0
          %493 = vmatprep.subr.mxu0 0.0
          %494 = vmatpush1.msra.mxu0 0.0
          %495 = vmatprep.subr.mxu0 0.0
          %496 = vmatpush1.msra.mxu0 0.0
          %497 = vmatprep.subr.mxu0 0.0
          %498 = vmatpush1.msra.mxu0 0.0
          %499 = vmatprep.subr.mxu0 0.0
          %500 = vmatpush1.msra.mxu0 0.0
          %501 = vmatprep.subr.mxu0 0.0
          %502 = vmatpush1.msra.mxu0 0.0
          %503 = vmatprep.subr.mxu0 0.0
          %504 = vmatpush1.msra.mxu0 0.0
          %505 = vmatprep.subr.mxu0 0.0
          %506 = vmatpush1.msra.mxu0 0.0
          %507 = vmatprep.subr.mxu0 0.0
          %508 = vmatpush1.msra.mxu0 0.0
          %509 = vmatprep.subr.mxu0 0.0
          %510 = vmatpush1.msra.mxu0 0.0
          %511 = vmatprep.subr.mxu0 0.0
          %512 = vmatpush1.msra.mxu0 0.0
          %513 = vmatprep.subr.mxu0 0.0
          %514 = vmatpush1.msra.mxu0 0.0
          %515 = vmatprep.subr.mxu0 0.0
          %516 = vmatpush1.msra.mxu0 0.0
          %517 = vmatprep.subr.mxu0 0.0
          %518 = vmatpush1.msra.mxu0 0.0
          %519 = vmatprep.subr.mxu0 0.0
          %520 = vmatpush1.msra.mxu0 0.0
          %521 = vmatprep.subr.mxu0 0.0
          %522 = vmatpush1.msra.mxu0 0.0
          %523 = vmatprep.subr.mxu0 0.0
          %524 = vmatpush1.msra.mxu0 0.0
          %525 = vmatprep.subr.mxu0 0.0
          %526 = vmatpush1.msra.mxu0 0.0
          %527 = vmatprep.mubr.f32.mxu0 0.0
          %528 = vmatmul.mubr.f32.gmra.mrb[0].mxu0 %v458
          %v529 = vpop.f32.mrb[0].mxu0
          %v530 = vadd.f32 %v426, %v529
          %v531 = vpop.f32.mrb[0].mxu0
          %532 = vmatprep.mubr.f32.mxu0 0.0
          %533 = vmatmul.mubr.f32.gmra.mrb[0].mxu0 %v461
          %v534 = vpop.f32.mrb[0].mxu0
          %v535 = vadd.f32 %v431, %v534
          %v536 = vpop.f32.mrb[0].mxu0
          %537 = vdwg.mxu0
          %538 = vst [vmem:[%s302] sm:$0xff] %v530
          %539 = vst [vmem:[%s302 + $0x8] sm:$0xff] %v535
        $region48: #{tpu_custom_call.1} parent=43 // pred_fallthru
          _
        // Predicated region
        $region49: #{tpu_custom_call.1} parent=43 // pred_check
          %p540 = pneg %p436
        $region50: #{tpu_custom_call.1} parent=43 // pred_check_branch
          %542 = sbr.rel (%p540) target = $region52
        $region51: #{tpu_custom_call.1} parent=43 // pred_region
          %v543 = vld [vmem:[%s326] sm:$0xff]
          %v544 = vld [vmem:[%s326 + $0x8] sm:$0xff]
          %v545 = vld [vmem:[%s3] sm:$0xff]
          %v546 = vld [vmem:[%s3 + $0x8] sm:$0xff]
          %vm547 = vcmask 130048
          %v549 = vsel %vm547, %v543, 0
          %v552 = vsel %vm547, %v544, 0
          %554 = vmatprep.subr.mxu0 0.0
          %555 = vmatpush1.msra.mxu0 %v545
          %556 = vmatprep.subr.mxu0 0.0
          %557 = vmatpush1.msra.mxu0 %v546
          %558 = vmatprep.subr.mxu0 0.0
          %559 = vmatpush1.msra.mxu0 0.0
          %560 = vmatprep.subr.mxu0 0.0
          %561 = vmatpush1.msra.mxu0 0.0
          %562 = vmatprep.subr.mxu0 0.0
          %563 = vmatpush1.msra.mxu0 0.0
          %564 = vmatprep.subr.mxu0 0.0
          %565 = vmatpush1.msra.mxu0 0.0
          %566 = vmatprep.subr.mxu0 0.0
          %567 = vmatpush1.msra.mxu0 0.0
          %568 = vmatprep.subr.mxu0 0.0
          %569 = vmatpush1.msra.mxu0 0.0
          %570 = vmatprep.subr.mxu0 0.0
          %571 = vmatpush1.msra.mxu0 0.0
          %572 = vmatprep.subr.mxu0 0.0
          %573 = vmatpush1.msra.mxu0 0.0
          %574 = vmatprep.subr.mxu0 0.0
          %575 = vmatpush1.msra.mxu0 0.0
          %576 = vmatprep.subr.mxu0 0.0
          %577 = vmatpush1.msra.mxu0 0.0
          %578 = vmatprep.subr.mxu0 0.0
          %579 = vmatpush1.msra.mxu0 0.0
          %580 = vmatprep.subr.mxu0 0.0
          %581 = vmatpush1.msra.mxu0 0.0
          %582 = vmatprep.subr.mxu0 0.0
          %583 = vmatpush1.msra.mxu0 0.0
          %584 = vmatprep.subr.mxu0 0.0
          %585 = vmatpush1.msra.mxu0 0.0
          %586 = vmatprep.subr.mxu0 0.0
          %587 = vmatpush1.msra.mxu0 0.0
          %588 = vmatprep.subr.mxu0 0.0
          %589 = vmatpush1.msra.mxu0 0.0
          %590 = vmatprep.subr.mxu0 0.0
          %591 = vmatpush1.msra.mxu0 0.0
          %592 = vmatprep.subr.mxu0 0.0
          %593 = vmatpush1.msra.mxu0 0.0
          %594 = vmatprep.subr.mxu0 0.0
          %595 = vmatpush1.msra.mxu0 0.0
          %596 = vmatprep.subr.mxu0 0.0
          %597 = vmatpush1.msra.mxu0 0.0
          %598 = vmatprep.subr.mxu0 0.0
          %599 = vmatpush1.msra.mxu0 0.0
          %600 = vmatprep.subr.mxu0 0.0
          %601 = vmatpush1.msra.mxu0 0.0
          %602 = vmatprep.subr.mxu0 0.0
          %603 = vmatpush1.msra.mxu0 0.0
          %604 = vmatprep.subr.mxu0 0.0
          %605 = vmatpush1.msra.mxu0 0.0
          %606 = vmatprep.subr.mxu0 0.0
          %607 = vmatpush1.msra.mxu0 0.0
          %608 = vmatprep.subr.mxu0 0.0
          %609 = vmatpush1.msra.mxu0 0.0
          %610 = vmatprep.subr.mxu0 0.0
          %611 = vmatpush1.msra.mxu0 0.0
          %612 = vmatprep.subr.mxu0 0.0
          %613 = vmatpush1.msra.mxu0 0.0
          %614 = vmatprep.subr.mxu0 0.0
          %615 = vmatpush1.msra.mxu0 0.0
          %616 = vmatprep.subr.mxu0 0.0
          %617 = vmatpush1.msra.mxu0 0.0
          %618 = vmatprep.mubr.f32.mxu0 0.0
          %619 = vmatmul.mubr.f32.gmra.mrb[0].mxu0 %v549
          %v620 = vpop.f32.mrb[0].mxu0
          %v621 = vadd.f32 %v426, %v620
          %v622 = vpop.f32.mrb[0].mxu0
          %623 = vmatprep.mubr.f32.mxu0 0.0
          %624 = vmatmul.mubr.f32.gmra.mrb[0].mxu0 %v552
          %v625 = vpop.f32.mrb[0].mxu0
          %v626 = vadd.f32 %v431, %v625
          %v627 = vpop.f32.mrb[0].mxu0
          %628 = vdwg.mxu0
          %629 = vst [vmem:[%s302] sm:$0xff] %v621
          %630 = vst [vmem:[%s302 + $0x8] sm:$0xff] %v626
        $region52: #{tpu_custom_call.1} parent=43 // pred_fallthru
          _
        %p631 = scmp.gt.s32.totalorder %s434, 28
        %p632 = scmp.lt.s32.totalorder %s332, 28
        %p633 = pnand %p631, %p632
        %p634 = pneg %p633
        // Predicated region
        $region53: #{tpu_custom_call.1} parent=43 // pred_check
          _
        $region54: #{tpu_custom_call.1} parent=43 // pred_check_branch
          %636 = sbr.rel (%p633) target = $region56
        $region55: #{tpu_custom_call.1} parent=43 // pred_region
          %v637 = vlaneseq
          %v638 = vshrl.u32 %v637, 7
          %v639 = vadd.s32 %v638, 8
          %v640 = vstv %s332
          %v641 = vadd.s32 %v640, %v638
          %v642 = vadd.s32 %v640, %v639
          %vm643 = vcmp.lt.s32.totalorder %v641, 28
          %vm644 = vcmp.lt.s32.totalorder %v642, 28
          %v645 = vld [vmem:[%s309] sm:$0xff]
          %v646 = vld [vmem:[%s309 + $0x8] sm:$0xff]
          %647 = vset.pattern.permute.xlu0 0
          %648 = vperm.xlu0 %647, %v645
          %v649 = vpop.permute.xlu0 %648
          %650 = vset.pattern.permute.xlu0 0
          %651 = vperm.xlu0 %650, %v646
          %v652 = vpop.permute.xlu0 %651
          %vm653 = vcmp.eq.s32.totalorder %v649, %v336
          %vm654 = vcmp.eq.s32.totalorder %v652, %v336
          %v655 = vsel %vm653, 1, 0
          %v656 = vsel %vm654, 1, 0
          %v657 = vcvt.s32.f32 %v655
          %v658 = vcvt.s32.f32 %v656
          %v659 = vld [vmem:[%s2] sm:$0xff]
          %v660 = vld [vmem:[%s2 + $0x8] sm:$0xff]
          %vm661 = vcmask 130048
          %v663 = vsel %vm661, %v657, 0
          %v666 = vsel %vm661, %v658, 0
          %668 = vmatprep.subr.mxu0 0.0
          %669 = vmatpush1.msra.mxu0 %v659
          %670 = vmatprep.subr.mxu0 0.0
          %671 = vmatpush1.msra.mxu0 %v660
          %672 = vmatprep.subr.mxu0 0.0
          %673 = vmatpush1.msra.mxu0 0.0
          %674 = vmatprep.subr.mxu0 0.0
          %675 = vmatpush1.msra.mxu0 0.0
          %676 = vmatprep.subr.mxu0 0.0
          %677 = vmatpush1.msra.mxu0 0.0
          %678 = vmatprep.subr.mxu0 0.0
          %679 = vmatpush1.msra.mxu0 0.0
          %680 = vmatprep.subr.mxu0 0.0
          %681 = vmatpush1.msra.mxu0 0.0
          %682 = vmatprep.subr.mxu0 0.0
          %683 = vmatpush1.msra.mxu0 0.0
          %684 = vmatprep.subr.mxu0 0.0
          %685 = vmatpush1.msra.mxu0 0.0
          %686 = vmatprep.subr.mxu0 0.0
          %687 = vmatpush1.msra.mxu0 0.0
          %688 = vmatprep.subr.mxu0 0.0
          %689 = vmatpush1.msra.mxu0 0.0
          %690 = vmatprep.subr.mxu0 0.0
          %691 = vmatpush1.msra.mxu0 0.0
          %692 = vmatprep.subr.mxu0 0.0
          %693 = vmatpush1.msra.mxu0 0.0
          %694 = vmatprep.subr.mxu0 0.0
          %695 = vmatpush1.msra.mxu0 0.0
          %696 = vmatprep.subr.mxu0 0.0
          %697 = vmatpush1.msra.mxu0 0.0
          %698 = vmatprep.subr.mxu0 0.0
          %699 = vmatpush1.msra.mxu0 0.0
          %700 = vmatprep.subr.mxu0 0.0
          %701 = vmatpush1.msra.mxu0 0.0
          %702 = vmatprep.subr.mxu0 0.0
          %703 = vmatpush1.msra.mxu0 0.0
          %704 = vmatprep.subr.mxu0 0.0
          %705 = vmatpush1.msra.mxu0 0.0
          %706 = vmatprep.subr.mxu0 0.0
          %707 = vmatpush1.msra.mxu0 0.0
          %708 = vmatprep.subr.mxu0 0.0
          %709 = vmatpush1.msra.mxu0 0.0
          %710 = vmatprep.subr.mxu0 0.0
          %711 = vmatpush1.msra.mxu0 0.0
          %712 = vmatprep.subr.mxu0 0.0
          %713 = vmatpush1.msra.mxu0 0.0
          %714 = vmatprep.subr.mxu0 0.0
          %715 = vmatpush1.msra.mxu0 0.0
          %716 = vmatprep.subr.mxu0 0.0
          %717 = vmatpush1.msra.mxu0 0.0
          %718 = vmatprep.subr.mxu0 0.0
          %719 = vmatpush1.msra.mxu0 0.0
          %720 = vmatprep.subr.mxu0 0.0
          %721 = vmatpush1.msra.mxu0 0.0
          %722 = vmatprep.subr.mxu0 0.0
          %723 = vmatpush1.msra.mxu0 0.0
          %724 = vmatprep.subr.mxu0 0.0
          %725 = vmatpush1.msra.mxu0 0.0
          %726 = vmatprep.subr.mxu0 0.0
          %727 = vmatpush1.msra.mxu0 0.0
          %728 = vmatprep.subr.mxu0 0.0
          %729 = vmatpush1.msra.mxu0 0.0
          %730 = vmatprep.subr.mxu0 0.0
          %731 = vmatpush1.msra.mxu0 0.0
          %732 = vmatprep.mubr.f32.mxu0 0.0
          %733 = vmatmul.mubr.f32.gmra.mrb[0].mxu0 %v663
          %v734 = vpop.f32.mrb[0].mxu0
          %v735 = vadd.f32 0.0, %v734
          %v736 = vpop.f32.mrb[0].mxu0
          %737 = vmatprep.mubr.f32.mxu0 0.0
          %738 = vmatmul.mubr.f32.gmra.mrb[0].mxu0 %v666
          %v739 = vpop.f32.mrb[0].mxu0
          %v740 = vadd.f32 0.0, %v739
          %v741 = vpop.f32.mrb[0].mxu0
          %742 = vdwg.mxu0
          %v743 = vld [vmem:[%s326] sm:$0xff]
          %v744 = vld [vmem:[%s326 + $0x8] sm:$0xff]
          %v745 = vld [vmem:[%s3] sm:$0xff]
          %v746 = vld [vmem:[%s3 + $0x8] sm:$0xff]
          %v748 = vsel %vm661, %v743, 0
          %v751 = vsel %vm661, %v744, 0
          %753 = vmatprep.subr.mxu0 0.0
          %754 = vmatpush1.msra.mxu0 %v745
          %755 = vmatprep.subr.mxu0 0.0
          %756 = vmatpush1.msra.mxu0 %v746
          %757 = vmatprep.subr.mxu0 0.0
          %758 = vmatpush1.msra.mxu0 0.0
          %759 = vmatprep.subr.mxu0 0.0
          %760 = vmatpush1.msra.mxu0 0.0
          %761 = vmatprep.subr.mxu0 0.0
          %762 = vmatpush1.msra.mxu0 0.0
          %763 = vmatprep.subr.mxu0 0.0
          %764 = vmatpush1.msra.mxu0 0.0
          %765 = vmatprep.subr.mxu0 0.0
          %766 = vmatpush1.msra.mxu0 0.0
          %767 = vmatprep.subr.mxu0 0.0
          %768 = vmatpush1.msra.mxu0 0.0
          %769 = vmatprep.subr.mxu0 0.0
          %770 = vmatpush1.msra.mxu0 0.0
          %771 = vmatprep.subr.mxu0 0.0
          %772 = vmatpush1.msra.mxu0 0.0
          %773 = vmatprep.subr.mxu0 0.0
          %774 = vmatpush1.msra.mxu0 0.0
          %775 = vmatprep.subr.mxu0 0.0
          %776 = vmatpush1.msra.mxu0 0.0
          %777 = vmatprep.subr.mxu0 0.0
          %778 = vmatpush1.msra.mxu0 0.0
          %779 = vmatprep.subr.mxu0 0.0
          %780 = vmatpush1.msra.mxu0 0.0
          %781 = vmatprep.subr.mxu0 0.0
          %782 = vmatpush1.msra.mxu0 0.0
          %783 = vmatprep.subr.mxu0 0.0
          %784 = vmatpush1.msra.mxu0 0.0
          %785 = vmatprep.subr.mxu0 0.0
          %786 = vmatpush1.msra.mxu0 0.0
          %787 = vmatprep.subr.mxu0 0.0
          %788 = vmatpush1.msra.mxu0 0.0
          %789 = vmatprep.subr.mxu0 0.0
          %790 = vmatpush1.msra.mxu0 0.0
          %791 = vmatprep.subr.mxu0 0.0
          %792 = vmatpush1.msra.mxu0 0.0
          %793 = vmatprep.subr.mxu0 0.0
          %794 = vmatpush1.msra.mxu0 0.0
          %795 = vmatprep.subr.mxu0 0.0
          %796 = vmatpush1.msra.mxu0 0.0
          %797 = vmatprep.subr.mxu0 0.0
          %798 = vmatpush1.msra.mxu0 0.0
          %799 = vmatprep.subr.mxu0 0.0
          %800 = vmatpush1.msra.mxu0 0.0
          %801 = vmatprep.subr.mxu0 0.0
          %802 = vmatpush1.msra.mxu0 0.0
          %803 = vmatprep.subr.mxu0 0.0
          %804 = vmatpush1.msra.mxu0 0.0
          %805 = vmatprep.subr.mxu0 0.0
          %806 = vmatpush1.msra.mxu0 0.0
          %807 = vmatprep.subr.mxu0 0.0
          %808 = vmatpush1.msra.mxu0 0.0
          %809 = vmatprep.subr.mxu0 0.0
          %810 = vmatpush1.msra.mxu0 0.0
          %811 = vmatprep.subr.mxu0 0.0
          %812 = vmatpush1.msra.mxu0 0.0
          %813 = vmatprep.subr.mxu0 0.0
          %814 = vmatpush1.msra.mxu0 0.0
          %815 = vmatprep.subr.mxu0 0.0
          %816 = vmatpush1.msra.mxu0 0.0
          %817 = vmatprep.mubr.f32.mxu0 0.0
          %818 = vmatmul.mubr.f32.gmra.mrb[0].mxu0 %v748
          %v819 = vpop.f32.mrb[0].mxu0
          %v820 = vadd.f32 0.0, %v819
          %v821 = vpop.f32.mrb[0].mxu0
          %822 = vmatprep.mubr.f32.mxu0 0.0
          %823 = vmatmul.mubr.f32.gmra.mrb[0].mxu0 %v751
          %v824 = vpop.f32.mrb[0].mxu0
          %v825 = vadd.f32 0.0, %v824
          %v826 = vpop.f32.mrb[0].mxu0
          %827 = vdwg.mxu0
          %v828 = vsel %vm643, 1, 0
          %v829 = vsel %vm644, 1, 0
          %vm830 = vcmp.eq.s32.totalorder %v828, 1
          %vm831 = vcmp.eq.s32.totalorder %v829, 1
          %v832 = vsel %vm830, %v735, %v820
          %v833 = vsel %vm831, %v740, %v825
          %v834 = vadd.f32 %v832, %v426
          %v835 = vadd.f32 %v833, %v431
          %836 = vst [vmem:[%s302] sm:$0xff] %v834
          %837 = vst [vmem:[%s302 + $0x8] sm:$0xff] %v835
        $region56: #{tpu_custom_call.1} parent=43 // pred_fallthru
          _
        %s838 = sand.u32 %s179, 1
        %s839 = scalar_lea.sflag [#allocation3], %s838
        %s840 = sand.u32 %s179, 1
        %s841 = smul.addr %s840, 16
        %s842 = scalar_lea.vmem [#allocation2], %s841
        // Predicated region
        $region57: #{tpu_custom_call.1} parent=43 // pred_check
          %p843 = pneg %p189
        $region58: #{tpu_custom_call.1} parent=43 // pred_check_branch
          %845 = sbr.rel (%p843) target = $region60
        $region59: #{tpu_custom_call.1} parent=43 // pred_region
          %s846 = smul.u32 2, %s20
          %s848 = ssub.s32 256, 256
          %849 = vsyncadd %s839, %s848
          %s850 = smul.addr %s846, 128
          %s851 = scalar_lea.hbm %s6, %s850
          %s852 = sshll.u32 %s842, 4
          %s853 = int_to_ptr.vmem [resolvable:$true] %s852
          %858 = dma.vmem_to_hbm [thread:$0]  %s853, 256, %s851, %s839, 128, 128, 8
        $region60: #{tpu_custom_call.1} parent=43 // pred_fallthru
          _
      $region44: #{tpu_custom_call.1} parent=5 // pred_fallthru
        _
      %p859 = scmp.le.s32.totalorder 2, %s15
      // Predicated region
      $region61: #{tpu_custom_call.1} parent=5 // pred_check
        %p860 = pneg %p859
      $region62: #{tpu_custom_call.1} parent=5 // pred_check_branch
        %862 = sbr.rel (%p860) target = $region64
      $region63: #{tpu_custom_call.1} parent=5 // pred_region
        %s863 = ssub.s32 %s15, 2
        // Predicated region
        $region65: #{tpu_custom_call.1} parent=63 // pred_check
          %p864 = pneg %p195
        $region66: #{tpu_custom_call.1} parent=63 // pred_check_branch
          %866 = sbr.rel (%p864) target = $region68
        $region67: #{tpu_custom_call.1} parent=63 // pred_region
          %s867 = sand.u32 %s180, 1
          %s868 = scalar_lea.sflag [#allocation3], %s867
          %s869 = sand.u32 %s180, 1
          %s870 = smul.addr %s869, 16
          %s871 = scalar_lea.vmem [#allocation2], %s870
          %872 = dma.done %s868, 256
        $region68: #{tpu_custom_call.1} parent=63 // pred_fallthru
          _
      $region64: #{tpu_custom_call.1} parent=5 // pred_fallthru
        _
    $region6: #{tpu_custom_call.1} parent=1 // loop_footer
      %s19 = sadd.s32 1, %s15
    $region7: #{tpu_custom_call.1} parent=1 // loop_footer_branch
      %14 = sbr.rel target = $region3
    $region8: #{tpu_custom_call.1} parent=1 // loop_exit
      _
    %873 = vsyncpa [#allocation3], 1
    %s874 = scalar_lea.sflag [#allocation3], 1
    %875 = vsyncpa %s874, 1

</llo_original>
